<compile_context>
chip_gen: v7x
topology: tpu7x:2x2x1
jax: 0.10.0
libtpu: 0.0.40
codegen_flags: <defaults>
</compile_context>

<pallas_src>
import functools

import jax
import jax.numpy as jnp
from jax.experimental import pallas as pl
from jax.experimental.pallas import tpu as pltpu


# --------------------------------------------------------------------------
# helpers
# --------------------------------------------------------------------------

def _round_up(x, m):
    return ((x + m - 1) // m) * m


_VMEM_LIMIT = 32 * 1024 * 1024   # safe scoped-VMEM limit on v5e/v6e/v7x
_LANES = 128


# --------------------------------------------------------------------------
# Fused classification (weighted CE) + regression kernel
# --------------------------------------------------------------------------

def _small_losses_kernel(logits_ref, tgt_ref, w_ref, src_ref, gtp_ref, nump_ref,
                         cls_ref, reg_ref, acc_num_ref, acc_den_ref, *, use_l2):
    i = pl.program_id(0)

    @pl.when(i == 0)
    def _init():
        acc_num_ref[...] = jnp.zeros_like(acc_num_ref)
        acc_den_ref[...] = jnp.zeros_like(acc_den_ref)
        # Matched-point regression (tiny tensor; compute once).
        d = src_ref[...].astype(jnp.float32) - gtp_ref[...].astype(jnp.float32)
        per_elem = d * d if use_l2 else jnp.abs(d)
        reg_ref[...] = jnp.reshape(
            jnp.sum(per_elem) / (nump_ref[0] + 1e-7), (1, 1))

    # Weighted softmax cross-entropy over this (TM, Kp) row tile.
    logits = logits_ref[...].astype(jnp.float32)             # (TM, Kp)
    TM, K = logits.shape
    tgt = tgt_ref[...]                                        # (TM, 1) int32, -1 = row padding
    w = w_ref[...].astype(jnp.float32)                        # (1, Kp), 0 on padded classes

    m = jnp.max(logits, axis=-1, keepdims=True)
    lse = jnp.log(jnp.sum(jnp.exp(logits - m), axis=-1, keepdims=True)) + m
    logp = logits - lse                                       # (TM, Kp)
    onehot = (jax.lax.broadcasted_iota(jnp.int32, (TM, K), 1) == tgt
              ).astype(jnp.float32)                           # 0 for padded rows / classes
    nll = -jnp.sum(onehot * logp, axis=-1, keepdims=True)     # (TM, 1)
    wi = jnp.sum(onehot * w, axis=-1, keepdims=True)          # (TM, 1)

    acc_num_ref[...] = acc_num_ref[...] + jnp.reshape(jnp.sum(wi * nll), (1, 1))
    acc_den_ref[...] = acc_den_ref[...] + jnp.reshape(jnp.sum(wi), (1, 1))

    @pl.when(i == pl.num_programs(0) - 1)
    def _finalize():
        # PyTorch weighted-mean CE semantics: sum(w[t]*nll) / sum(w[t]).
        # (If every matched class weight is zero this is NaN, matching
        #  F.cross_entropy's edge-case behavior.)
        cls_ref[...] = acc_num_ref[...] / acc_den_ref[...]


def classification_and_regression_losses(logits_bnk, targets_bn, class_weight_k,
                                         src_points, target_points, num_points,
                                         use_l2=True):
    """Returns (loss_cls, loss_reg) with the PyTorch semantics:
       loss_cls == F.cross_entropy(logits.transpose(1,2), targets, weight)
       loss_reg == (mse|l1)(src, tgt).sum() / (num_points + 1e-7)."""
    B, N, K = logits_bnk.shape
    M = B * N
    logits2 = logits_bnk.reshape(M, K)                        # native dtype
    tgt2 = targets_bn.reshape(M, 1).astype(jnp.int32)
    w2 = class_weight_k.reshape(1, K).astype(jnp.float32)

    # Lane-dense class dim: pad K to a multiple of 128 (padded logits -> -1e30
    # so exp underflows to 0; padded weights -> 0) => unmasked, dense vlds.
    Kp = _round_up(K, _LANES)
    if Kp != K:
        logits2 = jnp.pad(logits2, ((0, 0), (0, Kp - K)), constant_values=-1e30)
        w2 = jnp.pad(w2, ((0, 0), (0, Kp - K)))

    # Step-overhead bound, not VMEM bound: take the largest row tile that keeps
    # the double-buffered logits slab a few MiB (typically a single grid step).
    M8 = _round_up(M, 8)
    tm_vmem = max(8, (((4 * 1024 * 1024) // (Kp * 4)) // 8) * 8)
    TM = min(2048, tm_vmem, M8)
    n_tiles = -(-M // TM)
    Mp = n_tiles * TM
    if Mp != M:
        logits2 = jnp.pad(logits2, ((0, Mp - M), (0, 0)))
        tgt2 = jnp.pad(tgt2, ((0, Mp - M), (0, 0)), constant_values=-1)

    Mr, Dr = src_points.shape
    nump = jnp.reshape(num_points, (1,)).astype(jnp.float32)

    cls_out, reg_out = pl.pallas_call(
        functools.partial(_small_losses_kernel, use_l2=use_l2),
        out_shape=(jax.ShapeDtypeStruct((1, 1), jnp.float32),
                   jax.ShapeDtypeStruct((1, 1), jnp.float32)),
        grid=(n_tiles,),
        in_specs=[
            pl.BlockSpec((TM, Kp), lambda i: (i, 0)),          # logits tile
            pl.BlockSpec((TM, 1), lambda i: (i, 0)),           # targets tile
            pl.BlockSpec((1, Kp), lambda i: (0, 0)),           # class weights (resident)
            pl.BlockSpec((Mr, Dr), lambda i: (0, 0)),          # matched src points
            pl.BlockSpec((Mr, Dr), lambda i: (0, 0)),          # matched gt points
            pl.BlockSpec(memory_space=pltpu.MemorySpace.SMEM),  # num_points scalar
        ],
        out_specs=(pl.BlockSpec((1, 1), lambda i: (0, 0)),
                   pl.BlockSpec((1, 1), lambda i: (0, 0))),
        scratch_shapes=[pltpu.VMEM((1, 1), jnp.float32),        # sum w[t]*nll
                        pltpu.VMEM((1, 1), jnp.float32)],       # sum w[t]
        compiler_params=pltpu.CompilerParams(
            dimension_semantics=("arbitrary",),
            vmem_limit_bytes=_VMEM_LIMIT),
    )(logits2, tgt2, w2, src_points, target_points, nump)
    return cls_out[0, 0], reg_out[0, 0]


# --------------------------------------------------------------------------
# Binary focal loss over masks (sigmoid focal, alpha=0.25, gamma=2, mean)
# --------------------------------------------------------------------------

def _focal_kernel(pred_ref, gt_ref, out_ref, *, alpha, rows_valid):
    x = pred_ref[...].astype(jnp.float32)       # (TR, 128) mask logits
    t = gt_ref[...].astype(jnp.float32)         # (TR, 128) hard 0/1 targets (any input dtype)
    TR, L = x.shape

    # Sigmoid focal loss (gamma=2) with only two transcendental chains/element:
    #   sp = softplus(-x) = -log(sigmoid(x))    (EUP)
    #   p  = exp(-sp)     = sigmoid(x)          (EUP)
    #   q  = 1 - p        ;  -log(1 - p) = x + sp   (pure VPU)
    sp = -jax.nn.log_sigmoid(x)
    p = jnp.exp(-sp)
    q = 1.0 - p
    loss = jnp.where(t > 0.5,
                     alpha * q * q * sp,
                     (1.0 - alpha) * p * p * (x + sp))

    # Boundary tiles read past the slab -> mask garbage rows by index.
    rid = jax.lax.broadcasted_iota(jnp.int32, (TR, L), 0) + pl.program_id(0) * TR
    loss = jnp.where(rid < rows_valid, loss, 0.0)

    # Per-lane partial (VPU adds + a single sublane reduce); the cheap
    # cross-lane / cross-tile finish happens outside the kernel.
    partial = jnp.sum(loss, axis=0, keepdims=True)             # (1, 128)
    out_ref[...] = jnp.broadcast_to(partial[None], (1, 8, L))


def binary_focal_loss(pred_bhw, gt_bhw, alpha=0.25):
    # TODO(synk): BinaryFocalLoss is not defined in the reference module; this
    # implements the standard sigmoid focal loss (alpha=0.25, gamma=2, mean).
    B, H, W = pred_bhw.shape
    total = B * H * W

    # gt keeps its native (possibly narrow) dtype -- no wrapper upcast to the
    # pred dtype; the f32 cast happens per tile inside the kernel.
    if gt_bhw.dtype == jnp.bool_:
        gt_bhw = gt_bhw.astype(jnp.uint8)

    if total % (8 * _LANES) == 0:
        # Zero-copy path: straight reshape to a lane-dense (rows, 128) slab.
        rows = total // _LANES
        pred2 = pred_bhw.reshape(rows, _LANES)
        gt2 = gt_bhw.reshape(rows, _LANES)
    else:
        # Awkward shapes: flatten + minimal pad.  pred pads with -100 and gt
        # with 0, which makes the focal loss of padded elements exactly 0
        # (p == 0 and x + softplus(-x) == 0), so no element sentinel is needed.
        rows = _round_up(-(-total // _LANES), 8)
        Lp = rows * _LANES
        pred2 = jnp.pad(pred_bhw.reshape(-1), (0, Lp - total),
                        constant_values=-100.0).reshape(rows, _LANES)
        gt2 = jnp.pad(gt_bhw.reshape(-1), (0, Lp - total)).reshape(rows, _LANES)

    # Big row tiles on every generation (a double-buffered f32 tile pair at
    # TR=2048 is ~4 MiB -- far under the scoped VMEM limit on v5e/v6e/v7x).
    TR = min(2048, rows)
    n_tiles = -(-rows // TR)

    kernel = functools.partial(_focal_kernel, alpha=alpha, rows_valid=rows)
    out_shape = jax.ShapeDtypeStruct((n_tiles, 8, _LANES), jnp.float32)
    in_specs = [pl.BlockSpec((TR, _LANES), lambda i: (i, 0)),
                pl.BlockSpec((TR, _LANES), lambda i: (i, 0))]
    out_specs = pl.BlockSpec((1, 8, _LANES), lambda i: (i, 0, 0))

    # True 2-TensorCore sharding on v7x needs CORE_PARALLEL; fall back to the
    # portable "parallel" config on generations / versions where it won't lower.
    semantics_candidates = []
    core_parallel = getattr(pltpu, "CORE_PARALLEL", None)
    if core_parallel is not None:
        semantics_candidates.append((core_parallel,))
    semantics_candidates.append(("parallel",))

    partials, last_err = None, None
    for sem in semantics_candidates:
        try:
            partials = pl.pallas_call(
                kernel,
                out_shape=out_shape,
                grid=(n_tiles,),
                in_specs=in_specs,
                out_specs=out_specs,
                compiler_params=pltpu.CompilerParams(
                    dimension_semantics=sem,
                    vmem_limit_bytes=_VMEM_LIMIT),
            )(pred2, gt2)
            partials = jax.block_until_ready(partials)
            break
        except Exception as e:   # fall back to the known-good configuration
            partials, last_err = None, e
    if partials is None:
        raise last_err

    return jnp.sum(partials[:, 0, :]) / jnp.float32(total)


# --------------------------------------------------------------------------
# Criterion (JAX port). Gather / index plumbing stays in plain JAX; all of the
# numerical reductions run inside the two Pallas kernels above.
# --------------------------------------------------------------------------

class Criterion:
    def __init__(self, num_classes, matcher, class_weight, loss_weight, reg_loss_type='l2'):
        self.matcher = matcher
        self.num_classes = num_classes
        self.loss_weight = loss_weight
        self.class_weight = class_weight
        self.reg_loss_type = reg_loss_type

    @staticmethod
    def _get_src_permutation_idx(indices):
        batch_idx = jnp.concatenate(
            [jnp.full_like(src, i) for i, (src, _) in enumerate(indices)])
        src_idx = jnp.concatenate([src for src, _ in indices])
        return batch_idx, src_idx

    def forward(self, outputs, targets, epoch):
        num_points = float(sum(targets['gt_nums']))
        # single host/device: world_size == 1, no all_reduce
        num_points = jnp.maximum(jnp.asarray(num_points, jnp.float32), 1.0)

        indices = self.matcher(outputs, targets)
        batch_idx, src_idx = self._get_src_permutation_idx(indices)

        # ---- regression pairs (matched queries <-> GT points)
        src_points = outputs['pred_coords'][batch_idx, src_idx]                  # (M, 2)
        target_points = jnp.concatenate(
            [gt_points[J] for gt_points, (_, J) in zip(targets['gt_points'], indices)],
            axis=0)                                                              # (M, 2)

        # ---- classification targets (background = num_classes elsewhere)
        src_logits = outputs['pred_logits']                                      # (B, N, K)
        B, N, _ = src_logits.shape
        target_classes = jnp.full((B, N), self.num_classes, dtype=jnp.int32)
        target_classes_o = jnp.concatenate(
            [cls[J] for cls, (_, J) in zip(targets['gt_labels'], indices)]).astype(jnp.int32)
        target_classes = target_classes.at[batch_idx, src_idx].set(target_classes_o)

        loss_cls, loss_reg = classification_and_regression_losses(
            src_logits, target_classes, self.class_weight,
            src_points, target_points, num_points,
            use_l2=(self.reg_loss_type == 'l2'))

        # ---- mask focal loss
        pred_masks = jnp.squeeze(outputs['pred_masks'], axis=1)                  # (B, H, W)
        loss_mask = binary_focal_loss(pred_masks, targets['gt_masks'])

        losses = {'loss_reg': loss_reg, 'loss_cls': loss_cls, 'loss_mask': loss_mask}
        for k in losses:
            assert k in self.loss_weight
            losses[k] = losses[k] * self.loss_weight[k](epoch)
        return losses


# --------------------------------------------------------------------------
# Demo
# --------------------------------------------------------------------------

def simple_matcher(outputs, targets):
    """Deterministic stand-in for the external Hungarian matcher: matches the
    first gt_nums[b] queries to the GT points in order."""
    indices = []
    for b, n in enumerate(targets['gt_nums']):
        src = jnp.arange(n, dtype=jnp.int32)
        tgt = jnp.arange(n, dtype=jnp.int32)
        indices.append((src, tgt))
    return indices


if __name__ == "__main__":
    key = jax.random.PRNGKey(0)
    B, N, C, D, H, W = 2, 8, 4, 2, 32, 32          # batch, queries, classes, coord-dim, H, W
    k1, k2, k3, k4, k5, k6 = jax.random.split(key, 6)

    outputs = {
        'pred_logits': jax.random.normal(k1, (B, N, C + 1), jnp.float32),
        'pred_coords': jax.nn.sigmoid(jax.random.normal(k2, (B, N, D), jnp.float32)),
        'pred_masks':  jax.random.normal(k3, (B, 1, H, W), jnp.float32),
    }
    gt_nums = [3, 2]
    targets = {
        'gt_nums':   gt_nums,
        'gt_points': [jax.random.uniform(k4, (gt_nums[0], D), jnp.float32),
                      jax.random.uniform(k5, (gt_nums[1], D), jnp.float32)],
        'gt_labels': [jnp.array([0, 2, 1], jnp.int32),
                      jnp.array([3, 1], jnp.int32)],
        'gt_masks':  (jax.random.normal(k6, (B, H, W), jnp.float32) > 0.0).astype(jnp.float32),
    }

    class_weight = jnp.ones((C + 1,), jnp.float32).at[-1].set(0.1)   # down-weight background
    loss_weight = {
        'loss_reg':  lambda epoch: 2.0,
        'loss_cls':  lambda epoch: 1.0,
        'loss_mask': lambda epoch: 5.0,
    }

    crit = Criterion(num_classes=C, matcher=simple_matcher,
                     class_weight=class_weight, loss_weight=loss_weight,
                     reg_loss_type='l2')
    losses = crit.forward(outputs, targets, epoch=10)
    losses = jax.block_until_ready(losses)
    print("KERNEL_OK")
</pallas_src>

<mosaic_0001>
module attributes {stable_mosaic.version = 11 : i64} {
  func.func @_small_losses_kernel(%arg0: i32, %arg1: memref<16x128xf32, #tpu.memory_space<vmem>>, %arg2: memref<16x1xi32, #tpu.memory_space<vmem>>, %arg3: memref<1x128xf32, #tpu.memory_space<vmem>>, %arg4: memref<5x2xf32, #tpu.memory_space<vmem>>, %arg5: memref<5x2xf32, #tpu.memory_space<vmem>>, %arg6: memref<1xf32, #tpu.memory_space<smem>>, %arg7: memref<1x1xf32, #tpu.memory_space<vmem>>, %arg8: memref<1x1xf32, #tpu.memory_space<vmem>>, %arg9: memref<1x1xf32, #tpu.memory_space<vmem>>, %arg10: memref<1x1xf32, #tpu.memory_space<vmem>>) attributes {dimension_semantics = [#tpu.dimension_semantics<arbitrary>], iteration_bounds = array<i64: 1>, scalar_prefetch = 0 : i64, scratch_operands = 2 : i64, tpu.core_type = #tpu.core_type<tc>, window_params = [{transform_indices = @transform_0, window_bounds = array<i64: 16, 128>}, {transform_indices = @transform_1, window_bounds = array<i64: 16, 1>}, {pipeline_mode = #tpu.pipeline_mode<synchronous>, transform_indices = @transform_2, window_bounds = array<i64: 1, 128>}, {pipeline_mode = #tpu.pipeline_mode<synchronous>, transform_indices = @transform_3, window_bounds = array<i64: 5, 2>}, {pipeline_mode = #tpu.pipeline_mode<synchronous>, transform_indices = @transform_4, window_bounds = array<i64: 5, 2>}, {transform_indices = @transform_5, window_bounds = array<i64: 1>}, {pipeline_mode = #tpu.pipeline_mode<synchronous>, transform_indices = @transform_6, window_bounds = array<i64: 1, 1>}, {pipeline_mode = #tpu.pipeline_mode<synchronous>, transform_indices = @transform_7, window_bounds = array<i64: 1, 1>}]} {
    %c0_i32 = arith.constant 0 : i32
    %0 = arith.cmpi eq, %arg0, %c0_i32 : i32
    %1 = arith.extui %0 : i1 to i32
    %c0_i32_0 = arith.constant 0 : i32
    %2 = arith.cmpi ne, %1, %c0_i32_0 : i32
    scf.if %2 {
      %cst_22 = arith.constant 0.000000e+00 : f32
      %51 = vector.broadcast %cst_22 : f32 to vector<1x1xf32>
      %c0_23 = arith.constant 0 : index
      %c0_24 = arith.constant 0 : index
      %52 = vector.load %arg9[%c0_23, %c0_24] : memref<1x1xf32, #tpu.memory_space<vmem>>, vector<1x1xf32>
      tpu.vector_store %arg9[%c0_23, %c0_24], %51 {strides = array<i32>} : memref<1x1xf32, #tpu.memory_space<vmem>>, vector<1x1xf32>,
      %cst_25 = arith.constant 0.000000e+00 : f32
      %53 = vector.broadcast %cst_25 : f32 to vector<1x1xf32>
      %c0_26 = arith.constant 0 : index
      %c0_27 = arith.constant 0 : index
      %54 = vector.load %arg10[%c0_26, %c0_27] : memref<1x1xf32, #tpu.memory_space<vmem>>, vector<1x1xf32>
      tpu.vector_store %arg10[%c0_26, %c0_27], %53 {strides = array<i32>} : memref<1x1xf32, #tpu.memory_space<vmem>>, vector<1x1xf32>,
      %c0_28 = arith.constant 0 : index
      %c0_29 = arith.constant 0 : index
      %55 = vector.load %arg4[%c0_28, %c0_29] : memref<5x2xf32, #tpu.memory_space<vmem>>, vector<5x2xf32>
      %c0_30 = arith.constant 0 : index
      %c0_31 = arith.constant 0 : index
      %56 = vector.load %arg5[%c0_30, %c0_31] : memref<5x2xf32, #tpu.memory_space<vmem>>, vector<5x2xf32>
      %57 = arith.subf %55, %56 : vector<5x2xf32>
      %58 = arith.mulf %57, %57 : vector<5x2xf32>
      %59 = vector.shape_cast %58 : vector<5x2xf32> to vector<1x5x2xf32>
      %cst_32 = arith.constant dense<0.000000e+00> : vector<1xf32>
      %60 = vector.multi_reduction <add>, %59, %cst_32 [1, 2] : vector<1x5x2xf32> to vector<1xf32>
      %61 = vector.shape_cast %60 : vector<1xf32> to vector<1x1x1xf32>
      %62 = vector.extract %61[0, 0, 0] : f32 from vector<1x1x1xf32>
      %c0_33 = arith.constant 0 : index
      %63 = memref.load %arg6[%c0_33] : memref<1xf32, #tpu.memory_space<smem>>
      %cst_34 = arith.constant 1.000000e-07 : f32
      %64 = arith.addf %63, %cst_34 : f32
      %65 = arith.divf %62, %64 : f32
      %66 = vector.broadcast %65 : f32 to vector<1x1xf32>
      %c0_35 = arith.constant 0 : index
      %c0_36 = arith.constant 0 : index
      %67 = vector.load %arg8[%c0_35, %c0_36] : memref<1x1xf32, #tpu.memory_space<vmem>>, vector<1x1xf32>
      tpu.vector_store %arg8[%c0_35, %c0_36], %66 {strides = array<i32>} : memref<1x1xf32, #tpu.memory_space<vmem>>, vector<1x1xf32>,
    } else {
    }
    %c0 = arith.constant 0 : index
    %c0_1 = arith.constant 0 : index
    %3 = vector.load %arg1[%c0, %c0_1] : memref<16x128xf32, #tpu.memory_space<vmem>>, vector<16x128xf32>
    %c0_2 = arith.constant 0 : index
    %c0_3 = arith.constant 0 : index
    %4 = vector.load %arg2[%c0_2, %c0_3] : memref<16x1xi32, #tpu.memory_space<vmem>>, vector<16x1xi32>
    %c0_4 = arith.constant 0 : index
    %c0_5 = arith.constant 0 : index
    %5 = vector.load %arg3[%c0_4, %c0_5] : memref<1x128xf32, #tpu.memory_space<vmem>>, vector<1x128xf32>
    %cst = arith.constant dense<0xFF800000> : vector<16xf32>
    %6 = vector.multi_reduction <maximumf>, %3, %cst [1] : vector<16x128xf32> to vector<16xf32>
    %7 = vector.shape_cast %6 : vector<16xf32> to vector<16x1xf32>
    %8 = vector.broadcast %7 : vector<16x1xf32> to vector<16x128xf32>
    %9 = arith.subf %3, %8 : vector<16x128xf32>
    %10 = math.exp %9 : vector<16x128xf32>
    %cst_6 = arith.constant dense<0.000000e+00> : vector<16xf32>
    %11 = vector.multi_reduction <add>, %10, %cst_6 [1] : vector<16x128xf32> to vector<16xf32>
    %12 = vector.shape_cast %11 : vector<16xf32> to vector<16x1xf32>
    %13 = math.log %12 : vector<16x1xf32>
    %14 = arith.addf %13, %7 : vector<16x1xf32>
    %15 = vector.broadcast %14 : vector<16x1xf32> to vector<16x128xf32>
    %16 = arith.subf %3, %15 : vector<16x128xf32>
    %17 = tpu.iota {dimensions = array<i32: 1>} : vector<16x128xi32>
    %18 = vector.broadcast %4 : vector<16x1xi32> to vector<16x128xi32>
    %19 = arith.cmpi eq, %17, %18 : vector<16x128xi32>
    %20 = arith.extui %19 : vector<16x128xi1> to vector<16x128xi32>
    %21 = arith.sitofp %20 : vector<16x128xi32> to vector<16x128xf32>
    %22 = arith.mulf %21, %16 : vector<16x128xf32>
    %cst_7 = arith.constant dense<0.000000e+00> : vector<16xf32>
    %23 = vector.multi_reduction <add>, %22, %cst_7 [1] : vector<16x128xf32> to vector<16xf32>
    %24 = vector.shape_cast %23 : vector<16xf32> to vector<16x1xf32>
    %cst_8 = arith.constant 0.000000e+00 : f32
    %25 = vector.broadcast %cst_8 : f32 to vector<16x1xf32>
    %26 = arith.subf %25, %24 : vector<16x1xf32>
    %27 = vector.broadcast %5 : vector<1x128xf32> to vector<16x128xf32>
    %28 = arith.mulf %21, %27 : vector<16x128xf32>
    %cst_9 = arith.constant dense<0.000000e+00> : vector<16xf32>
    %29 = vector.multi_reduction <add>, %28, %cst_9 [1] : vector<16x128xf32> to vector<16xf32>
    %30 = vector.shape_cast %29 : vector<16xf32> to vector<16x1xf32>
    %c0_10 = arith.constant 0 : index
    %c0_11 = arith.constant 0 : index
    %31 = vector.load %arg9[%c0_10, %c0_11] : memref<1x1xf32, #tpu.memory_space<vmem>>, vector<1x1xf32>
    %32 = arith.mulf %30, %26 : vector<16x1xf32>
    %33 = vector.shape_cast %32 : vector<16x1xf32> to vector<1x16x1xf32>
    %cst_12 = arith.constant dense<0.000000e+00> : vector<1xf32>
    %34 = vector.multi_reduction <add>, %33, %cst_12 [1, 2] : vector<1x16x1xf32> to vector<1xf32>
    %35 = vector.shape_cast %34 : vector<1xf32> to vector<1x1x1xf32>
    %36 = vector.extract %35[0, 0, 0] : f32 from vector<1x1x1xf32>
    %37 = vector.broadcast %36 : f32 to vector<1x1xf32>
    %38 = arith.addf %31, %37 : vector<1x1xf32>
    %c0_13 = arith.constant 0 : index
    %c0_14 = arith.constant 0 : index
    %39 = vector.load %arg9[%c0_13, %c0_14] : memref<1x1xf32, #tpu.memory_space<vmem>>, vector<1x1xf32>
    tpu.vector_store %arg9[%c0_13, %c0_14], %38 {strides = array<i32>} : memref<1x1xf32, #tpu.memory_space<vmem>>, vector<1x1xf32>,
    %c0_15 = arith.constant 0 : index
    %c0_16 = arith.constant 0 : index
    %40 = vector.load %arg10[%c0_15, %c0_16] : memref<1x1xf32, #tpu.memory_space<vmem>>, vector<1x1xf32>
    %41 = vector.shape_cast %30 : vector<16x1xf32> to vector<1x16x1xf32>
    %cst_17 = arith.constant dense<0.000000e+00> : vector<1xf32>
    %42 = vector.multi_reduction <add>, %41, %cst_17 [1, 2] : vector<1x16x1xf32> to vector<1xf32>
    %43 = vector.shape_cast %42 : vector<1xf32> to vector<1x1x1xf32>
    %44 = vector.extract %43[0, 0, 0] : f32 from vector<1x1x1xf32>
    %45 = vector.broadcast %44 : f32 to vector<1x1xf32>
    %46 = arith.addf %40, %45 : vector<1x1xf32>
    %c0_18 = arith.constant 0 : index
    %c0_19 = arith.constant 0 : index
    %47 = vector.load %arg10[%c0_18, %c0_19] : memref<1x1xf32, #tpu.memory_space<vmem>>, vector<1x1xf32>
    tpu.vector_store %arg10[%c0_18, %c0_19], %46 {strides = array<i32>} : memref<1x1xf32, #tpu.memory_space<vmem>>, vector<1x1xf32>,
    %c0_i32_20 = arith.constant 0 : i32
    %48 = arith.cmpi eq, %arg0, %c0_i32_20 : i32
    %49 = arith.extui %48 : i1 to i32
    %c0_i32_21 = arith.constant 0 : i32
    %50 = arith.cmpi ne, %49, %c0_i32_21 : i32
    scf.if %50 {
      %c0_22 = arith.constant 0 : index
      %c0_23 = arith.constant 0 : index
      %51 = vector.load %arg9[%c0_22, %c0_23] : memref<1x1xf32, #tpu.memory_space<vmem>>, vector<1x1xf32>
      %c0_24 = arith.constant 0 : index
      %c0_25 = arith.constant 0 : index
      %52 = vector.load %arg10[%c0_24, %c0_25] : memref<1x1xf32, #tpu.memory_space<vmem>>, vector<1x1xf32>
      %53 = arith.divf %51, %52 : vector<1x1xf32>
      %c0_26 = arith.constant 0 : index
      %c0_27 = arith.constant 0 : index
      %54 = vector.load %arg7[%c0_26, %c0_27] : memref<1x1xf32, #tpu.memory_space<vmem>>, vector<1x1xf32>
      tpu.vector_store %arg7[%c0_26, %c0_27], %53 {strides = array<i32>} : memref<1x1xf32, #tpu.memory_space<vmem>>, vector<1x1xf32>,
    } else {
    }
    return
  }
  func.func @transform_0(%arg0: i32) -> (i32, i32) {
    %c0_i32 = arith.constant 0 : i32
    %c0_i32_0 = arith.constant 0 : i32
    return %arg0, %c0_i32 : i32, i32
  }
  func.func @transform_1(%arg0: i32) -> (i32, i32) {
    %c0_i32 = arith.constant 0 : i32
    %c0_i32_0 = arith.constant 0 : i32
    return %arg0, %c0_i32 : i32, i32
  }
  func.func @transform_2(%arg0: i32) -> (i32, i32) {
    %c0_i32 = arith.constant 0 : i32
    %c0_i32_0 = arith.constant 0 : i32
    %c0_i32_1 = arith.constant 0 : i32
    return %c0_i32, %c0_i32_0 : i32, i32
  }
  func.func @transform_3(%arg0: i32) -> (i32, i32) {
    %c0_i32 = arith.constant 0 : i32
    %c0_i32_0 = arith.constant 0 : i32
    %c0_i32_1 = arith.constant 0 : i32
    return %c0_i32, %c0_i32_0 : i32, i32
  }
  func.func @transform_4(%arg0: i32) -> (i32, i32) {
    %c0_i32 = arith.constant 0 : i32
    %c0_i32_0 = arith.constant 0 : i32
    %c0_i32_1 = arith.constant 0 : i32
    return %c0_i32, %c0_i32_0 : i32, i32
  }
  func.func @transform_5(%arg0: i32) -> i32 {
    %c0_i32 = arith.constant 0 : i32
    %c0_i32_0 = arith.constant 0 : i32
    return %c0_i32 : i32
  }
  func.func @transform_6(%arg0: i32) -> (i32, i32) {
    %c0_i32 = arith.constant 0 : i32
    %c0_i32_0 = arith.constant 0 : i32
    %c0_i32_1 = arith.constant 0 : i32
    return %c0_i32, %c0_i32_0 : i32, i32
  }
  func.func @transform_7(%arg0: i32) -> (i32, i32) {
    %c0_i32 = arith.constant 0 : i32
    %c0_i32_0 = arith.constant 0 : i32
    %c0_i32_1 = arith.constant 0 : i32
    return %c0_i32, %c0_i32_0 : i32, i32
  }
}

</mosaic_0001>

<llo_original>
// kernel: tpu_custom_call.1
$region0: #{tpu_custom_call.1}
  #allocation0 [shape = 'u32[]', space=smem, size = 0x4, offset = 0x4, fixed_abs, tag = 'smem constant byte address 0x4 - core index']
  #allocation1 [shape = 'u32[144,128]{1,0:T(1,128)}', space=vmem, size = 0x12000, scoped, tag = 'internal scratch']
  #allocation2 [shape = 'f32[1,1]{1,0:T(1,128)}', space=vmem, size = 0x200, scoped, tag = 'scratch operand']
  #allocation3 [shape = 'f32[1,1]{1,0:T(1,128)}', space=vmem, size = 0x200, scoped, tag = 'scratch operand']
  #allocation4 [shape = 'f32[1]{0:T(128)S(6)}', space=smem, size = 0x200, scoped, tag = 'scoped memory for tpu_custom_call.1']
  %s0 = inlined_call_operand.vmem [shape: f32[16,128], index: 0, kind: input, shape index: {}]
  %s1 = inlined_call_operand.vmem [shape: s32[16,1], index: 1, kind: input, shape index: {}]
  %s2 = inlined_call_operand.vmem [shape: f32[1,128], index: 2, kind: input, shape index: {}]
  %s3 = inlined_call_operand.vmem [shape: f32[5,2], index: 3, kind: input, shape index: {}]
  %s4 = inlined_call_operand.vmem [shape: f32[5,2], index: 4, kind: input, shape index: {}]
  %s5 = inlined_call_operand.<no memory space> [shape: f32[1], index: 5, kind: input, shape index: {}]
  %s6 = inlined_call_operand.hbm [shape: f32[1,1], index: 6, kind: output, shape index: {0}]
  %s7 = inlined_call_operand.hbm [shape: f32[1,1], index: 7, kind: output, shape index: {1}]
  %8 = xla_tuple %s6, %s7
  %s9 = sld [smem:[#allocation0]]
  $region50: #{tpu_custom_call.1} parent=0
    _
  %s11 = ssub.s32 1, %s9
  %s12 = scalar_select 0, %s11, %s9
  %13 = sst [smem:[#allocation4]] %s5
  $region1: #{tpu_custom_call.1} parent=0
    #allocation5 [shape = 'u8[512]{0}', space=vmem, size = 0x400, scoped, tag = 'output window, operand 0, single buffered']
    #allocation6 [shape = 's32[1]{0}', space=sflag, size = 0x4, scoped, tag = 'scoped memory for tpu_custom_call.1']
    #allocation7 [shape = 'u8[512]{0}', space=vmem, size = 0x400, scoped, tag = 'output window, operand 1, single buffered']
    #allocation8 [shape = 's32[1]{0}', space=sflag, size = 0x4, scoped, tag = 'scoped memory for tpu_custom_call.1']
    %14 = vsyncpa [#allocation6], 0
    %15 = vsyncpa [#allocation8], 0
    // Predicated region
    $region2: #{tpu_custom_call.1} parent=1 // pred_check
      _
    $region3: #{tpu_custom_call.1} parent=1 // pred_check_branch
      %17 = sbr.rel (0) target = $region5
    $region4: #{tpu_custom_call.1} parent=1 // pred_region
      _
    $region5: #{tpu_custom_call.1} parent=1 // pred_fallthru
      _
    // Predicated region
    $region6: #{tpu_custom_call.1} parent=1 // pred_check
      _
    $region7: #{tpu_custom_call.1} parent=1 // pred_check_branch
      %19 = sbr.rel (0) target = $region9
    $region8: #{tpu_custom_call.1} parent=1 // pred_region
      _
    $region9: #{tpu_custom_call.1} parent=1 // pred_fallthru
      _
    // Predicated region
    $region10: #{tpu_custom_call.1} parent=1 // pred_check
      _
    $region11: #{tpu_custom_call.1} parent=1 // pred_check_branch
      %21 = sbr.rel (0) target = $region13
    $region12: #{tpu_custom_call.1} parent=1 // pred_region
      _
    $region13: #{tpu_custom_call.1} parent=1 // pred_fallthru
      _
    // Predicated region
    $region14: #{tpu_custom_call.1} parent=1 // pred_check
      _
    $region15: #{tpu_custom_call.1} parent=1 // pred_check_branch
      %23 = sbr.rel (0) target = $region17
    $region16: #{tpu_custom_call.1} parent=1 // pred_region
      _
    $region17: #{tpu_custom_call.1} parent=1 // pred_fallthru
      _
    // Predicated region
    $region18: #{tpu_custom_call.1} parent=1 // pred_check
      _
    $region19: #{tpu_custom_call.1} parent=1 // pred_check_branch
      %25 = sbr.rel (0) target = $region21
    $region20: #{tpu_custom_call.1} parent=1 // pred_region
      _
    $region21: #{tpu_custom_call.1} parent=1 // pred_fallthru
      _
    // Predicated region
    $region22: #{tpu_custom_call.1} parent=1 // pred_check
      _
    $region23: #{tpu_custom_call.1} parent=1 // pred_check_branch
      %27 = sbr.rel (0) target = $region25
    $region24: #{tpu_custom_call.1} parent=1 // pred_region
      _
    $region25: #{tpu_custom_call.1} parent=1 // pred_fallthru
      _
    %p28 = scmp.eq.s32.totalorder 0, 0
    // Predicated region
    $region26: #{tpu_custom_call.1} parent=1 // pred_check
      %p29 = pneg %p28
    $region27: #{tpu_custom_call.1} parent=1 // pred_check_branch
      %31 = sbr.rel (%p29) target = $region29
    $region28: #{tpu_custom_call.1} parent=1 // pred_region
      %vm32 = vcmask 0
      %33 = vst.msk [vmem:[#allocation2] sm:$0x1] %vm32, 0.0
      %34 = vst.msk [vmem:[#allocation3] sm:$0x1] %vm32, 0.0
      %v35 = vld [vmem:[%s3] sm:$0x1f]
      %v36 = vld [vmem:[%s4] sm:$0x1f]
      %v37 = vsub.f32 %v35, %v36
      %v38 = vmul.f32 %v37, %v37
      %vm39 = vcmask 12288
      %v40 = vsel %vm39, %v38, 0.0
      %41 = vadd.xlane.f32.xlu0 %v40
      %v42 = vpop.xlane.xlu0 %41
      %v43 = vrot.slane %v42, 4
      %v44 = vadd.f32 %v42, %v43
      %v45 = vrot.slane %v44, 2
      %v46 = vadd.f32 %v44, %v45
      %v47 = vrot.slane %v46, 1
      %v48 = vadd.f32 %v46, %v47
      %s49 = vtos %v48
      %s50 = sld [smem:[#allocation4]]
      %s51 = sadd.f32 %s50, 1e-07
      %v52 = vstv %s51
      %v53 = vrcp.pop %v52
      %s54 = vtos %v53
      %s55 = smul.f32 %s49, %s54
      %v56 = vstv %s55
      %57 = vst.msk [vmem:[#allocation7] sm:$0x1] %vm32, %v56
    $region29: #{tpu_custom_call.1} parent=1 // pred_fallthru
      _
    %v58 = vld [vmem:[%s0] sm:$0xff]
    %v59 = vld [vmem:[%s0 + $0x8] sm:$0xff]
    %v60 = vld [vmem:[%s1] sm:$0xff]
    %v61 = vld [vmem:[%s1 + $0x8] sm:$0xff]
    %v62 = vld [vmem:[%s2] sm:$0x1]
    %63 = vmax.xlane.f32.xlu0 %v58
    %v64 = vpop.xlane.xlu0 %63
    %65 = vmax.xlane.f32.xlu0 %v59
    %v66 = vpop.xlane.xlu0 %65
    %v67 = vsub.f32 %v58, %v64
    %v68 = vsub.f32 %v59, %v66
    %v69 = vmul.f32 %v67, 1.442695
    %v70 = vpow.pop %v69
    %v71 = vmul.f32 %v68, 1.442695
    %v72 = vpow.pop %v71
    %73 = vadd.xlane.f32.xlu0 %v70
    %v74 = vpop.xlane.xlu0 %73
    %75 = vadd.xlane.f32.xlu0 %v72
    %v76 = vpop.xlane.xlu0 %75
    %v77 = vlog2.pop %v74
    %v78 = vmul.f32 %v77, 0.6931472
    %v79 = vlog2.pop %v76
    %v80 = vmul.f32 %v79, 0.6931472
    %v81 = vadd.f32 %v78, %v64
    %v82 = vadd.f32 %v80, %v66
    %v83 = vsub.f32 %v58, %v81
    %v84 = vsub.f32 %v59, %v82
    %v85 = vlaneseq
    %v86 = vand.u32 %v85, 127
    %87 = vset.pattern.permute.xlu0 0
    %88 = vperm.xlu0 %87, %v60
    %v89 = vpop.permute.xlu0 %88
    %90 = vset.pattern.permute.xlu0 0
    %91 = vperm.xlu0 %90, %v61
    %v92 = vpop.permute.xlu0 %91
    %vm93 = vcmp.eq.s32.totalorder %v86, %v89
    %vm94 = vcmp.eq.s32.totalorder %v86, %v92
    %v95 = vsel %vm93, 1, 0
    %v96 = vsel %vm94, 1, 0
    %v97 = vcvt.s32.f32 %v95
    %v98 = vcvt.s32.f32 %v96
    %v99 = vmul.f32 %v97, %v83
    %v100 = vmul.f32 %v98, %v84
    %101 = vadd.xlane.f32.xlu0 %v99
    %v102 = vpop.xlane.xlu0 %101
    %103 = vadd.xlane.f32.xlu0 %v100
    %v104 = vpop.xlane.xlu0 %103
    %v105 = vsub.f32 0.0, %v102
    %v106 = vsub.f32 0.0, %v104
    %v108 = vlaneseq
    %v109 = vshrl.u32 %v108, 7
    %v110 = vsub.s32 0, %v109
    %v111 = vrot.slane %v62, %v110
    %v113 = vmul.f32 %v97, %v111
    %v114 = vmul.f32 %v98, %v111
    %115 = vadd.xlane.f32.xlu0 %v113
    %v116 = vpop.xlane.xlu0 %115
    %117 = vadd.xlane.f32.xlu0 %v114
    %v118 = vpop.xlane.xlu0 %117
    %v119 = vld [vmem:[#allocation2] sm:$0x1]
    %v120 = vmul.f32 %v116, %v105
    %v121 = vmul.f32 %v118, %v106
    %vm122 = vcmask 7168
    %v123 = vsel %vm122, %v120, 0.0
    %v124 = vsel %vm122, %v121, 0.0
    %v125 = vadd.f32 %v123, %v124
    %126 = vadd.xlane.f32.xlu0 %v125
    %v127 = vpop.xlane.xlu0 %126
    %v128 = vrot.slane %v127, 4
    %v129 = vadd.f32 %v127, %v128
    %v130 = vrot.slane %v129, 2
    %v131 = vadd.f32 %v129, %v130
    %v132 = vrot.slane %v131, 1
    %v133 = vadd.f32 %v131, %v132
    %s134 = vtos %v133
    %v135 = vstv %s134
    %v136 = vadd.f32 %v119, %v135
    %vm137 = vcmask 0
    %138 = vst.msk [vmem:[#allocation2] sm:$0x1] %vm137, %v136
    %v139 = vld [vmem:[#allocation3] sm:$0x1]
    %v140 = vsel %vm122, %v116, 0.0
    %v141 = vsel %vm122, %v118, 0.0
    %v142 = vadd.f32 %v140, %v141
    %143 = vadd.xlane.f32.xlu0 %v142
    %v144 = vpop.xlane.xlu0 %143
    %v145 = vrot.slane %v144, 4
    %v146 = vadd.f32 %v144, %v145
    %v147 = vrot.slane %v146, 2
    %v148 = vadd.f32 %v146, %v147
    %v149 = vrot.slane %v148, 1
    %v150 = vadd.f32 %v148, %v149
    %s151 = vtos %v150
    %v152 = vstv %s151
    %v153 = vadd.f32 %v139, %v152
    %154 = vst.msk [vmem:[#allocation3] sm:$0x1] %vm137, %v153
    // Predicated region
    $region30: #{tpu_custom_call.1} parent=1 // pred_check
      %p155 = pneg %p28
    $region31: #{tpu_custom_call.1} parent=1 // pred_check_branch
      %157 = sbr.rel (%p155) target = $region33
    $region32: #{tpu_custom_call.1} parent=1 // pred_region
      %v158 = vld [vmem:[#allocation2] sm:$0x1]
      %v159 = vld [vmem:[#allocation3] sm:$0x1]
      %v160 = vrcp.pop %v159
      %v161 = vmul.f32 %v158, %v160
      %162 = vst.msk [vmem:[#allocation5] sm:$0x1] %vm137, %v161
    $region33: #{tpu_custom_call.1} parent=1 // pred_fallthru
      _
    // Predicated region
    $region34: #{tpu_custom_call.1} parent=1 // pred_check
      _
    $region35: #{tpu_custom_call.1} parent=1 // pred_check_branch
      %164 = sbr.rel (0) target = $region37
    $region36: #{tpu_custom_call.1} parent=1 // pred_region
      %s166 = ssub.s32 16, 16
      %167 = vsyncadd [#allocation6], %s166
      %s169 = sshll.u32 [#allocation5], 4
      %s170 = int_to_ptr.vmem [resolvable:$true] %s169
      %172 = dma.vmem_to_hbm [thread:$0]  %s170, 16, %s6, [#allocation6]
    $region37: #{tpu_custom_call.1} parent=1 // pred_fallthru
      _
    // Predicated region
    $region38: #{tpu_custom_call.1} parent=1 // pred_check
      _
    $region39: #{tpu_custom_call.1} parent=1 // pred_check_branch
      %174 = sbr.rel (0) target = $region41
    $region40: #{tpu_custom_call.1} parent=1 // pred_region
      %s176 = ssub.s32 16, 16
      %177 = vsyncadd [#allocation8], %s176
      %s179 = sshll.u32 [#allocation7], 4
      %s180 = int_to_ptr.vmem [resolvable:$true] %s179
      %182 = dma.vmem_to_hbm [thread:$0]  %s180, 16, %s7, [#allocation8]
    $region41: #{tpu_custom_call.1} parent=1 // pred_fallthru
      _
    // Predicated region
    $region42: #{tpu_custom_call.1} parent=1 // pred_check
      _
    $region43: #{tpu_custom_call.1} parent=1 // pred_check_branch
      %184 = sbr.rel (0) target = $region45
    $region44: #{tpu_custom_call.1} parent=1 // pred_region
      %185 = dma.done [#allocation6], 16
    $region45: #{tpu_custom_call.1} parent=1 // pred_fallthru
      _
    // Predicated region
    $region46: #{tpu_custom_call.1} parent=1 // pred_check
      _
    $region47: #{tpu_custom_call.1} parent=1 // pred_check_branch
      %187 = sbr.rel (0) target = $region49
    $region48: #{tpu_custom_call.1} parent=1 // pred_region
      %188 = dma.done [#allocation8], 16
    $region49: #{tpu_custom_call.1} parent=1 // pred_fallthru
      _
    %189 = vsyncpa [#allocation6], 1
    %190 = vsyncpa [#allocation8], 1

</llo_original>
